<compile_context>
chip_gen: v5e
topology: v5e:2x2
jax: 0.10.0
libtpu: 0.0.40
codegen_flags: <defaults>
</compile_context>

<pallas_src>
import math
import functools

import jax
import jax.numpy as jnp
from jax.experimental import pallas as pl
from jax.experimental.pallas import tpu as pltpu

LN_EPS = 1e-6                       # torchvision ViT uses LayerNorm(eps=1e-6)
VMEM_LIMIT = 64 * 1024 * 1024       # <= v7x physical VMEM, well under v5e/v6e
# TODO(synk): for full ViT-B on v7x, additionally single-buffer the
# grid-invariant weight blocks (or tile the MLP hidden dim) to stay in VMEM.


def _const_spec(arr):
    """Grid-invariant (weight) block: full array, block index always 0.

    Default-arg capture of the rank avoids the late-binding-lambda bug and
    works for any weight rank (2-D LN/bias, 3-D head-major Wo).
    """
    return pl.BlockSpec(arr.shape, lambda b, _nd=arr.ndim: (0,) * _nd)


# ---------------------------------------------------------------------------
# erf / exact GELU from exp / mul / add / where / reciprocal only
# (A&S 7.1.26, ~1.5e-7 abs err — matches torch's exact erf-GELU to fp32 noise;
# the approx reciprocal is below the bf16-weight error floor).
# ---------------------------------------------------------------------------
def _erf(x):
    a1, a2, a3, a4, a5 = (0.254829592, -0.284496736, 1.421413741,
                          -1.453152027, 1.061405429)
    p = 0.3275911
    ax = jnp.abs(x)
    t = pl.reciprocal(1.0 + p * ax, approx=True)          # EUP, not VALU
    poly = ((((a5 * t + a4) * t + a3) * t + a2) * t + a1) * t
    y = 1.0 - poly * jnp.exp(-ax * ax)
    return jnp.where(x >= 0, y, -y)


def _gelu_exact(x):
    return 0.5 * x * (1.0 + _erf(x * (1.0 / math.sqrt(2.0))))


# ---------------------------------------------------------------------------
# Kernel 1: fused patch embedding + class token + positional embedding.
# One image per grid step (S_pad rows per tile; pipelined & megacore-parallel).
# ---------------------------------------------------------------------------
def embed_kernel(p_ref, w_ref, b_ref, cls_ref, pos_ref, o_ref):
    # p_ref: (1, S_pad, K) patch matrix; row 0 and tail pad rows are zero.
    tok = jnp.dot(p_ref[0], w_ref[...],
                  preferred_element_type=jnp.float32) + b_ref[...]    # (S_pad, D)
    row = jax.lax.broadcasted_iota(jnp.int32, (tok.shape[0], 1), 0)
    seq = jnp.where(row == 0, cls_ref[...], tok)       # row 0 <- class token
    o_ref[0] = seq + pos_ref[...]                      # fused pos-embedding add


def embed_sequence(patches_pad, conv_w, conv_b, cls_tok, pos_pad):
    B, S_pad, K = patches_pad.shape
    D = conv_w.shape[1]
    return pl.pallas_call(
        embed_kernel,
        out_shape=jax.ShapeDtypeStruct((B, S_pad, D), jnp.float32),
        grid=(B,),
        in_specs=[pl.BlockSpec((1, S_pad, K), lambda b: (b, 0, 0)),
                  _const_spec(conv_w), _const_spec(conv_b),
                  _const_spec(cls_tok), _const_spec(pos_pad)],
        out_specs=pl.BlockSpec((1, S_pad, D), lambda b: (b, 0, 0)),
        compiler_params=pltpu.CompilerParams(
            dimension_semantics=("parallel",),
            vmem_limit_bytes=VMEM_LIMIT),
    )(patches_pad, conv_w, conv_b, cls_tok, pos_pad)


# ---------------------------------------------------------------------------
# Kernel 2: fused transformer encoder block (pre-LN MHA + pre-LN MLP),
# one batch element per grid step; final LayerNorm fused into the last block.
# ---------------------------------------------------------------------------
def encoder_block_kernel(x_ref, ln1w, ln1b, qkvw, qkvb, ow3, ob,
                         ln2w, ln2b, f1w, f1b, f2w, f2b, lnfw, lnfb, o_ref,
                         *, num_heads, n_valid, final_ln):
    x = x_ref[0]                                        # (S_pad, D) f32
    S, D = x.shape
    hd = D // num_heads

    def ln(v, w, b):
        mu = jnp.mean(v, axis=-1, keepdims=True)
        var = jnp.mean((v - mu) ** 2, axis=-1, keepdims=True)
        return (v - mu) * jax.lax.rsqrt(var + LN_EPS) * w[...] + b[...]

    def split_heads(mat, base):
        # Re-tile the (S, 3D) qkv slab into head-major (H, S, hd): static lane
        # slices + leading-axis concat only (layout plumbing, no MXU work).
        return jnp.concatenate(
            [mat[:, base + h * hd: base + (h + 1) * hd][None]
             for h in range(num_heads)], axis=0)

    # ---- multi-head self-attention: one big qkv matmul, heads batched ------
    # 1/sqrt(hd) is pre-folded into the q columns of qkvw/qkvb at trace time.
    h1 = ln(x, ln1w, ln1b).astype(jnp.bfloat16)
    qkv = jnp.dot(h1, qkvw[...], preferred_element_type=jnp.float32) + qkvb[...]
    q3 = split_heads(qkv, 0).astype(jnp.bfloat16)       # (H, S, hd)
    k3 = split_heads(qkv, D).astype(jnp.bfloat16)
    v3 = split_heads(qkv, 2 * D).astype(jnp.bfloat16)

    s = jnp.einsum('hqe,hke->hqk', q3, k3,
                   preferred_element_type=jnp.float32)                # (H,S,S)
    if n_valid < S:                                     # mask padded key rows
        col = jax.lax.broadcasted_iota(jnp.int32, (1, 1, S), 2)
        s = jnp.where(col < n_valid, s, -1e30)
    s = s - jnp.max(s, axis=-1, keepdims=True)
    p = jnp.exp(s)
    p = p * pl.reciprocal(jnp.sum(p, axis=-1, keepdims=True), approx=True)

    ctx = jnp.einsum('hqk,hke->hqe', p.astype(jnp.bfloat16), v3,
                     preferred_element_type=jnp.float32)              # (H,S,hd)
    # head-concat folded into the output projection: batched matmul + sum over h
    part = jnp.einsum('hqe,hef->hqf', ctx.astype(jnp.bfloat16), ow3[...],
                      preferred_element_type=jnp.float32)             # (H,S,D)
    x = x + jnp.sum(part, axis=0) + ob[...]

    # ---- MLP ----
    h2 = ln(x, ln2w, ln2b).astype(jnp.bfloat16)
    m = jnp.dot(h2, f1w[...], preferred_element_type=jnp.float32) + f1b[...]
    m = _gelu_exact(m).astype(jnp.bfloat16)
    y = x + jnp.dot(m, f2w[...], preferred_element_type=jnp.float32) + f2b[...]

    if final_ln:                                        # fused final LayerNorm
        y = ln(y, lnfw, lnfb)
    o_ref[0] = y


def _prep_layer(lp, num_heads):
    """PyTorch (out,in) weights -> x@W layout; big weights -> bf16; Wo head-major.

    The attention scale 1/sqrt(head_dim) is folded into the q columns of the
    qkv projection (trace-time, amortized) so the kernel never multiplies the
    (H,S,S) score tensor by a scalar.
    """
    D = lp['ln1_w'].shape[0]
    M = lp['f1_b'].shape[0]
    hd = D // num_heads
    scale = 1.0 / math.sqrt(hd)

    col_scale = jnp.concatenate([jnp.full((D,), scale, jnp.float32),
                                 jnp.ones((2 * D,), jnp.float32)])
    qkv_w = lp['qkv_w'].T * col_scale[None, :]          # (D, 3D), q cols scaled
    qkv_b = lp['qkv_b'] * col_scale

    return [
        lp['ln1_w'].reshape(1, D), lp['ln1_b'].reshape(1, D),
        qkv_w.astype(jnp.bfloat16), qkv_b.reshape(1, 3 * D),
        lp['out_w'].T.reshape(num_heads, hd, D).astype(jnp.bfloat16),
        lp['out_b'].reshape(1, D),
        lp['ln2_w'].reshape(1, D), lp['ln2_b'].reshape(1, D),
        lp['f1_w'].T.astype(jnp.bfloat16), lp['f1_b'].reshape(1, M),
        lp['f2_w'].T.astype(jnp.bfloat16), lp['f2_b'].reshape(1, D),
    ]


def encoder_block(x_seq, layer_w, lnf_w, lnf_b, *, num_heads, n_valid, final_ln):
    B, S, D = x_seq.shape
    weights = list(layer_w) + [lnf_w.reshape(1, D), lnf_b.reshape(1, D)]
    x_spec = pl.BlockSpec((1, S, D), lambda b: (b, 0, 0))
    kernel = functools.partial(encoder_block_kernel, num_heads=num_heads,
                               n_valid=n_valid, final_ln=final_ln)
    return pl.pallas_call(
        kernel,
        out_shape=jax.ShapeDtypeStruct((B, S, D), jnp.float32),
        grid=(B,),
        in_specs=[x_spec] + [_const_spec(w) for w in weights],
        out_specs=x_spec,
        compiler_params=pltpu.CompilerParams(
            dimension_semantics=("parallel",),
            vmem_limit_bytes=VMEM_LIMIT),
    )(x_seq, *weights)


# ---------------------------------------------------------------------------
# Full forward pass (glue in plain JAX, compute in Pallas)
# ---------------------------------------------------------------------------
def vision_encoder_forward(x, params):
    B, C, H, W = x.shape
    P = params['patch_size']
    D = params['hidden_dim']
    nh, nw = H // P, W // P
    N = nh * nw
    S = N + 1
    # Sublane-align the sequence (pad keys are masked in attention and the pad
    # rows dropped at the end). For v6e/v7x ViT-B one would round to 128/256.
    S_pad = ((S + 7) // 8) * 8

    # _process_input: conv_proj (kernel=stride=P) == patch-flatten + matmul.
    patches = x.reshape(B, C, nh, P, nw, P).transpose(0, 2, 4, 1, 3, 5)
    patches = patches.reshape(B, N, C * P * P)
    # row 0 reserved for the class token, tail rows are padding.
    patches = jnp.pad(patches, ((0, 0), (1, S_pad - S), (0, 0)))
    conv_w = params['conv_w'].reshape(D, C * P * P).T            # (K, D)
    pos = jnp.pad(params['pos_embedding'][0], ((0, S_pad - S), (0, 0)))

    x_seq = embed_sequence(patches, conv_w,
                           params['conv_b'].reshape(1, D),
                           params['class_token'].reshape(1, D), pos)

    n_layers = len(params['layers'])
    for i, lp in enumerate(params['layers']):
        x_seq = encoder_block(x_seq, _prep_layer(lp, params['num_heads']),
                              params['ln_w'], params['ln_b'],
                              num_heads=params['num_heads'],
                              n_valid=S, final_ln=(i == n_layers - 1))

    return x_seq[:, 1:S]                                         # drop cls + pad


# ---------------------------------------------------------------------------
# Deterministic synthetic parameters (shapes follow torchvision ViT, scaled down)
# TODO(synk): pretrained IMAGENET1K weights cannot be loaded in-script; using
# deterministic random parameters of the same structure instead.
# ---------------------------------------------------------------------------
def init_params(key, *, in_ch=3, patch=8, hidden=32, num_heads=4,
                mlp_dim=64, num_layers=2, seq_len=5):
    scale = 0.02
    keys = jax.random.split(key, 3 + num_layers)
    params = {
        'patch_size': patch,
        'hidden_dim': hidden,
        'num_heads': num_heads,
        'conv_w': scale * jax.random.normal(keys[0], (hidden, in_ch, patch, patch), jnp.float32),
        'conv_b': jnp.zeros((hidden,), jnp.float32),
        'class_token': scale * jax.random.normal(keys[1], (1, 1, hidden), jnp.float32),
        'pos_embedding': scale * jax.random.normal(keys[2], (1, seq_len, hidden), jnp.float32),
        'ln_w': jnp.ones((hidden,), jnp.float32),
        'ln_b': jnp.zeros((hidden,), jnp.float32),
        'layers': [],
    }
    for i in range(num_layers):
        lk = jax.random.split(keys[3 + i], 4)
        params['layers'].append({
            'ln1_w': jnp.ones((hidden,), jnp.float32),
            'ln1_b': jnp.zeros((hidden,), jnp.float32),
            'qkv_w': scale * jax.random.normal(lk[0], (3 * hidden, hidden), jnp.float32),
            'qkv_b': jnp.zeros((3 * hidden,), jnp.float32),
            'out_w': scale * jax.random.normal(lk[1], (hidden, hidden), jnp.float32),
            'out_b': jnp.zeros((hidden,), jnp.float32),
            'ln2_w': jnp.ones((hidden,), jnp.float32),
            'ln2_b': jnp.zeros((hidden,), jnp.float32),
            'f1_w': scale * jax.random.normal(lk[2], (mlp_dim, hidden), jnp.float32),
            'f1_b': jnp.zeros((mlp_dim,), jnp.float32),
            'f2_w': scale * jax.random.normal(lk[3], (hidden, mlp_dim), jnp.float32),
            'f2_b': jnp.zeros((hidden,), jnp.float32),
        })
    return params


if __name__ == "__main__":
    key = jax.random.PRNGKey(0)
    kx, kp = jax.random.split(key)

    B, C, H, W = 2, 3, 16, 16
    patch, hidden = 8, 32
    num_patches = (H // patch) * (W // patch)             # 4
    x = jax.random.normal(kx, (B, C, H, W), jnp.float32)
    params = init_params(kp, in_ch=C, patch=patch, hidden=hidden,
                         num_heads=4, mlp_dim=64, num_layers=2,
                         seq_len=num_patches + 1)

    out = vision_encoder_forward(x, params)
    out = jax.block_until_ready(out)
    assert out.shape == (B, num_patches, hidden), out.shape
    assert jnp.all(jnp.isfinite(out))
    print("KERNEL_OK")
</pallas_src>

<mosaic_0001>
module attributes {stable_mosaic.version = 11 : i64} {
  func.func @embed_kernel(%arg0: i32, %arg1: memref<1x8x192xf32, #tpu.memory_space<vmem>>, %arg2: memref<192x32xf32, #tpu.memory_space<vmem>>, %arg3: memref<1x32xf32, #tpu.memory_space<vmem>>, %arg4: memref<1x32xf32, #tpu.memory_space<vmem>>, %arg5: memref<8x32xf32, #tpu.memory_space<vmem>>, %arg6: memref<1x8x32xf32, #tpu.memory_space<vmem>>) attributes {dimension_semantics = [#tpu.dimension_semantics<parallel>], iteration_bounds = array<i64: 2>, scalar_prefetch = 0 : i64, scratch_operands = 0 : i64, tpu.core_type = #tpu.core_type<tc>, window_params = [{transform_indices = @transform_0, window_bounds = array<i64: 1, 8, 192>}, {pipeline_mode = #tpu.pipeline_mode<synchronous>, transform_indices = @transform_1, window_bounds = array<i64: 192, 32>}, {pipeline_mode = #tpu.pipeline_mode<synchronous>, transform_indices = @transform_2, window_bounds = array<i64: 1, 32>}, {pipeline_mode = #tpu.pipeline_mode<synchronous>, transform_indices = @transform_3, window_bounds = array<i64: 1, 32>}, {pipeline_mode = #tpu.pipeline_mode<synchronous>, transform_indices = @transform_4, window_bounds = array<i64: 8, 32>}, {transform_indices = @transform_5, window_bounds = array<i64: 1, 8, 32>}]} {
    %c0 = arith.constant 0 : index
    %c0_0 = arith.constant 0 : index
    %c0_1 = arith.constant 0 : index
    %0 = vector.load %arg1[%c0, %c0_0, %c0_1] : memref<1x8x192xf32, #tpu.memory_space<vmem>>, vector<1x8x192xf32>
    %1 = vector.shape_cast %0 : vector<1x8x192xf32> to vector<8x192xf32>
    %c0_2 = arith.constant 0 : index
    %c0_3 = arith.constant 0 : index
    %2 = vector.load %arg2[%c0_2, %c0_3] : memref<192x32xf32, #tpu.memory_space<vmem>>, vector<192x32xf32>
    %cst = arith.constant dense<0.000000e+00> : vector<8x32xf32>
    %3 = tpu.matmul %1, %2, %cst {dimension_numbers = #tpu.dot_dimension_numbers<[1], [0], [0], [1], [0, 0, 1, 1], [], []>} : vector<8x192xf32>, vector<192x32xf32>, vector<8x32xf32> -> vector<8x32xf32>
    %c0_4 = arith.constant 0 : index
    %c0_5 = arith.constant 0 : index
    %4 = vector.load %arg3[%c0_4, %c0_5] : memref<1x32xf32, #tpu.memory_space<vmem>>, vector<1x32xf32>
    %5 = vector.broadcast %4 : vector<1x32xf32> to vector<8x32xf32>
    %6 = arith.addf %3, %5 : vector<8x32xf32>
    %7 = tpu.iota {dimensions = array<i32: 0>} : vector<8x1xi32>
    %c0_i32 = arith.constant 0 : i32
    %8 = vector.broadcast %c0_i32 : i32 to vector<8x1xi32>
    %9 = arith.cmpi eq, %7, %8 : vector<8x1xi32>
    %c0_6 = arith.constant 0 : index
    %c0_7 = arith.constant 0 : index
    %10 = vector.load %arg4[%c0_6, %c0_7] : memref<1x32xf32, #tpu.memory_space<vmem>>, vector<1x32xf32>
    %11 = vector.shape_cast %9 : vector<8x1xi1> to vector<8x1xi1>
    %12 = vector.broadcast %11 : vector<8x1xi1> to vector<8x32xi1>
    %13 = vector.shape_cast %10 : vector<1x32xf32> to vector<1x32xf32>
    %14 = vector.broadcast %13 : vector<1x32xf32> to vector<8x32xf32>
    %15 = arith.select %12, %14, %6 : vector<8x32xi1>, vector<8x32xf32>
    %c0_8 = arith.constant 0 : index
    %c0_9 = arith.constant 0 : index
    %16 = vector.load %arg5[%c0_8, %c0_9] : memref<8x32xf32, #tpu.memory_space<vmem>>, vector<8x32xf32>
    %17 = arith.addf %15, %16 : vector<8x32xf32>
    %c0_10 = arith.constant 0 : index
    %c0_11 = arith.constant 0 : index
    %c0_12 = arith.constant 0 : index
    %18 = vector.load %arg6[%c0_10, %c0_11, %c0_12] : memref<1x8x32xf32, #tpu.memory_space<vmem>>, vector<1x8x32xf32>
    %19 = vector.shape_cast %18 : vector<1x8x32xf32> to vector<8x32xf32>
    %20 = vector.shape_cast %17 : vector<8x32xf32> to vector<1x8x32xf32>
    tpu.vector_store %arg6[%c0_10, %c0_11, %c0_12], %20 {strides = array<i32>} : memref<1x8x32xf32, #tpu.memory_space<vmem>>, vector<1x8x32xf32>,
    return
  }
  func.func @transform_0(%arg0: i32) -> (i32, i32, i32) {
    %c0_i32 = arith.constant 0 : i32
    %c0_i32_0 = arith.constant 0 : i32
    %c0_i32_1 = arith.constant 0 : i32
    return %arg0, %c0_i32, %c0_i32_0 : i32, i32, i32
  }
  func.func @transform_1(%arg0: i32) -> (i32, i32) {
    %c0_i32 = arith.constant 0 : i32
    %c0_i32_0 = arith.constant 0 : i32
    %c0_i32_1 = arith.constant 0 : i32
    return %c0_i32, %c0_i32_0 : i32, i32
  }
  func.func @transform_2(%arg0: i32) -> (i32, i32) {
    %c0_i32 = arith.constant 0 : i32
    %c0_i32_0 = arith.constant 0 : i32
    %c0_i32_1 = arith.constant 0 : i32
    return %c0_i32, %c0_i32_0 : i32, i32
  }
  func.func @transform_3(%arg0: i32) -> (i32, i32) {
    %c0_i32 = arith.constant 0 : i32
    %c0_i32_0 = arith.constant 0 : i32
    %c0_i32_1 = arith.constant 0 : i32
    return %c0_i32, %c0_i32_0 : i32, i32
  }
  func.func @transform_4(%arg0: i32) -> (i32, i32) {
    %c0_i32 = arith.constant 0 : i32
    %c0_i32_0 = arith.constant 0 : i32
    %c0_i32_1 = arith.constant 0 : i32
    return %c0_i32, %c0_i32_0 : i32, i32
  }
  func.func @transform_5(%arg0: i32) -> (i32, i32, i32) {
    %c0_i32 = arith.constant 0 : i32
    %c0_i32_0 = arith.constant 0 : i32
    %c0_i32_1 = arith.constant 0 : i32
    return %arg0, %c0_i32, %c0_i32_0 : i32, i32, i32
  }
}

</mosaic_0001>

<llo_original>
// kernel: tpu_custom_call.1
$region0: #{tpu_custom_call.1}
  #allocation0 [shape = 'u32[]', space=smem, size = 0x4, offset = 0x4, fixed_abs, tag = 'smem constant byte address 0x4 - core index']
  #allocation1 [shape = 'u32[72,128]{1,0:T(1,128)}', space=vmem, size = 0x9000, scoped, tag = 'internal scratch']
  %s0 = inlined_call_operand.vmem [shape: f32[2,8,192], index: 0, kind: input, shape index: {}]
  %s1 = inlined_call_operand.vmem [shape: f32[192,32], index: 1, kind: input, shape index: {}]
  %s2 = inlined_call_operand.vmem [shape: f32[1,32], index: 2, kind: input, shape index: {}]
  %s3 = inlined_call_operand.vmem [shape: f32[1,32], index: 3, kind: input, shape index: {}]
  %s4 = inlined_call_operand.vmem [shape: f32[8,32], index: 4, kind: input, shape index: {}]
  %s5 = inlined_call_operand.hbm [shape: f32[2,8,32], index: 5, kind: output, shape index: {}]
  %s6 = sld [smem:[#allocation0]]
  $region53: #{tpu_custom_call.1} parent=0
    _
  %s8 = ssub.s32 1, %s6
  %s9 = scalar_select 0, %s8, %s6
  $region1: #{tpu_custom_call.1} parent=0
    #allocation2 [shape = 'u8[8192]{0}', space=vmem, size = 0x2000, scoped, tag = 'output window, operand 0']
    #allocation3 [shape = 's32[2]{0}', space=sflag, size = 0x8, scoped, tag = 'scoped memory for tpu_custom_call.1']
    %10 = vsyncpa [#allocation3], 0
    %s11 = scalar_lea.sflag [#allocation3], 1
    %12 = vsyncpa %s11, 0
    loop: start=0, step=1, limit=4
    $region2: #{tpu_custom_call.1} parent=1 // loop_pre_header
      _
    $region3: #{tpu_custom_call.1} parent=1 // loop_header
      %s14 = sphi 0, %s18
      %p15 = scmp.ge.s32.totalorder %s14, 4
      %s24 = sphi 0, %s26
      %s27 = sphi 0, %s24
      %s28 = sphi 0, %s27
      %s44 = sphi 0, %s28
      %s48 = sphi 0, %s48
      %s50 = sphi 0, %s48
      %s51 = sphi 0, %s50
      %s65 = sphi 0, %s51
      %s69 = sphi 0, %s69
      %s71 = sphi 0, %s69
      %s72 = sphi 0, %s71
      %s86 = sphi 0, %s72
      %s90 = sphi 0, %s90
      %s92 = sphi 0, %s90
      %s93 = sphi 0, %s92
      %s107 = sphi 0, %s93
      %s111 = sphi 0, %s111
      %s113 = sphi 0, %s111
      %s114 = sphi 0, %s113
      %s128 = sphi 0, %s114
      %s134 = sphi 0, %s136
      %s137 = sphi 0, %s134
      %s138 = sphi 0, %s137
      %s154 = sphi 0, %s138
    $region4: #{tpu_custom_call.1} parent=1 // loop_header_branch
      %17 = sbr.rel (%p15) target = $region8
    $region5: #{tpu_custom_call.1} parent=1 // loop_body
      %s19 = ssub.s32 %s14, 1
      %s20 = ssub.s32 %s14, 2
      %s21 = sadd.s32 %s14, 1
      %s22 = ssub.s32 %s14, %s21
      %p23 = scmp.eq.s32.totalorder %s22, 0
      %s25 = sadd.s32 %s24, 1
      %s26 = scalar_select %p23, %s24, %s25
      %p29 = pneg %p23
      %p30 = scmp.eq.s32.totalorder %s14, 1
      %p31 = por %p29, %p30
      %p32 = scmp.ne.s32.totalorder %s24, %s27
      %p33 = scmp.eq.s32.totalorder %s14, 0
      %p34 = por %p32, %p33
      %p35 = scmp.ne.s32.totalorder %s24, %s27
      %p36 = scmp.eq.s32.totalorder %s19, 1
      %p37 = por %p35, %p36
      %p38 = scmp.ne.s32.totalorder %s27, %s28
      %p39 = scmp.eq.s32.totalorder %s19, 0
      %p40 = por %p38, %p39
      %p41 = scmp.ne.s32.totalorder %s27, %s28
      %p42 = scmp.eq.s32.totalorder %s20, 1
      %p43 = por %p41, %p42
      %p45 = scmp.ne.s32.totalorder %s28, %s44
      %p46 = scmp.eq.s32.totalorder %s20, 0
      %p47 = por %p45, %p46
      %s49 = sadd.s32 %s48, 1
      %p52 = scmp.eq.s32.totalorder %s14, 1
      %p53 = scmp.ne.s32.totalorder %s48, %s50
      %p54 = scmp.eq.s32.totalorder %s14, 0
      %p55 = por %p53, %p54
      %p56 = scmp.ne.s32.totalorder %s48, %s50
      %p57 = scmp.eq.s32.totalorder %s19, 1
      %p58 = por %p56, %p57
      %p59 = scmp.ne.s32.totalorder %s50, %s51
      %p60 = scmp.eq.s32.totalorder %s19, 0
      %p61 = por %p59, %p60
      %p62 = scmp.ne.s32.totalorder %s50, %s51
      %p63 = scmp.eq.s32.totalorder %s20, 1
      %p64 = por %p62, %p63
      %p66 = scmp.ne.s32.totalorder %s51, %s65
      %p67 = scmp.eq.s32.totalorder %s20, 0
      %p68 = por %p66, %p67
      %s70 = sadd.s32 %s69, 1
      %p73 = scmp.eq.s32.totalorder %s14, 1
      %p74 = scmp.ne.s32.totalorder %s69, %s71
      %p75 = scmp.eq.s32.totalorder %s14, 0
      %p76 = por %p74, %p75
      %p77 = scmp.ne.s32.totalorder %s69, %s71
      %p78 = scmp.eq.s32.totalorder %s19, 1
      %p79 = por %p77, %p78
      %p80 = scmp.ne.s32.totalorder %s71, %s72
      %p81 = scmp.eq.s32.totalorder %s19, 0
      %p82 = por %p80, %p81
      %p83 = scmp.ne.s32.totalorder %s71, %s72
      %p84 = scmp.eq.s32.totalorder %s20, 1
      %p85 = por %p83, %p84
      %p87 = scmp.ne.s32.totalorder %s72, %s86
      %p88 = scmp.eq.s32.totalorder %s20, 0
      %p89 = por %p87, %p88
      %s91 = sadd.s32 %s90, 1
      %p94 = scmp.eq.s32.totalorder %s14, 1
      %p95 = scmp.ne.s32.totalorder %s90, %s92
      %p96 = scmp.eq.s32.totalorder %s14, 0
      %p97 = por %p95, %p96
      %p98 = scmp.ne.s32.totalorder %s90, %s92
      %p99 = scmp.eq.s32.totalorder %s19, 1
      %p100 = por %p98, %p99
      %p101 = scmp.ne.s32.totalorder %s92, %s93
      %p102 = scmp.eq.s32.totalorder %s19, 0
      %p103 = por %p101, %p102
      %p104 = scmp.ne.s32.totalorder %s92, %s93
      %p105 = scmp.eq.s32.totalorder %s20, 1
      %p106 = por %p104, %p105
      %p108 = scmp.ne.s32.totalorder %s93, %s107
      %p109 = scmp.eq.s32.totalorder %s20, 0
      %p110 = por %p108, %p109
      %s112 = sadd.s32 %s111, 1
      %p115 = scmp.eq.s32.totalorder %s14, 1
      %p116 = scmp.ne.s32.totalorder %s111, %s113
      %p117 = scmp.eq.s32.totalorder %s14, 0
      %p118 = por %p116, %p117
      %p119 = scmp.ne.s32.totalorder %s111, %s113
      %p120 = scmp.eq.s32.totalorder %s19, 1
      %p121 = por %p119, %p120
      %p122 = scmp.ne.s32.totalorder %s113, %s114
      %p123 = scmp.eq.s32.totalorder %s19, 0
      %p124 = por %p122, %p123
      %p125 = scmp.ne.s32.totalorder %s113, %s114
      %p126 = scmp.eq.s32.totalorder %s20, 1
      %p127 = por %p125, %p126
      %p129 = scmp.ne.s32.totalorder %s114, %s128
      %p130 = scmp.eq.s32.totalorder %s20, 0
      %p131 = por %p129, %p130
      %s132 = ssub.s32 %s14, %s21
      %p133 = scmp.eq.s32.totalorder %s132, 0
      %s135 = sadd.s32 %s134, 1
      %s136 = scalar_select %p133, %s134, %s135
      %p139 = pneg %p133
      %p140 = scmp.eq.s32.totalorder %s14, 1
      %p141 = por %p139, %p140
      %p142 = scmp.ne.s32.totalorder %s134, %s137
      %p143 = scmp.eq.s32.totalorder %s14, 0
      %p144 = por %p142, %p143
      %p145 = scmp.ne.s32.totalorder %s134, %s137
      %p146 = scmp.eq.s32.totalorder %s19, 1
      %p147 = por %p145, %p146
      %p148 = scmp.ne.s32.totalorder %s137, %s138
      %p149 = scmp.eq.s32.totalorder %s19, 0
      %p150 = por %p148, %p149
      %p151 = scmp.ne.s32.totalorder %s137, %s138
      %p152 = scmp.eq.s32.totalorder %s20, 1
      %p153 = por %p151, %p152
      %p155 = scmp.ne.s32.totalorder %s138, %s154
      %p156 = scmp.eq.s32.totalorder %s20, 0
      %p157 = por %p155, %p156
      %p158 = scmp.le.s32.totalorder 1, %s14
      %p159 = scmp.lt.s32.totalorder %s14, 3
      %p160 = pnand %p158, %p159
      %p161 = pneg %p160
      // Predicated region
      $region9: #{tpu_custom_call.1} parent=5 // pred_check
        _
      $region10: #{tpu_custom_call.1} parent=5 // pred_check_branch
        %163 = sbr.rel (%p160) target = $region12
      $region11: #{tpu_custom_call.1} parent=5 // pred_region
        %s164 = ssub.s32 %s14, 1
        // Predicated region
        $region13: #{tpu_custom_call.1} parent=11 // pred_check
          %p165 = pneg %p61
        $region14: #{tpu_custom_call.1} parent=11 // pred_check_branch
          %167 = sbr.rel (%p165) target = $region16
        $region15: #{tpu_custom_call.1} parent=11 // pred_region
          _
        $region16: #{tpu_custom_call.1} parent=11 // pred_fallthru
          _
        // Predicated region
        $region17: #{tpu_custom_call.1} parent=11 // pred_check
          %p168 = pneg %p82
        $region18: #{tpu_custom_call.1} parent=11 // pred_check_branch
          %170 = sbr.rel (%p168) target = $region20
        $region19: #{tpu_custom_call.1} parent=11 // pred_region
          _
        $region20: #{tpu_custom_call.1} parent=11 // pred_fallthru
          _
        // Predicated region
        $region21: #{tpu_custom_call.1} parent=11 // pred_check
          %p171 = pneg %p103
        $region22: #{tpu_custom_call.1} parent=11 // pred_check_branch
          %173 = sbr.rel (%p171) target = $region24
        $region23: #{tpu_custom_call.1} parent=11 // pred_region
          _
        $region24: #{tpu_custom_call.1} parent=11 // pred_fallthru
          _
        // Predicated region
        $region25: #{tpu_custom_call.1} parent=11 // pred_check
          %p174 = pneg %p124
        $region26: #{tpu_custom_call.1} parent=11 // pred_check_branch
          %176 = sbr.rel (%p174) target = $region28
        $region27: #{tpu_custom_call.1} parent=11 // pred_region
          _
        $region28: #{tpu_custom_call.1} parent=11 // pred_fallthru
          _
      $region12: #{tpu_custom_call.1} parent=5 // pred_fallthru
        _
      %p177 = scmp.lt.s32.totalorder %s14, 2
      // Predicated region
      $region29: #{tpu_custom_call.1} parent=5 // pred_check
        %p178 = pneg %p177
      $region30: #{tpu_custom_call.1} parent=5 // pred_check_branch
        %180 = sbr.rel (%p178) target = $region32
      $region31: #{tpu_custom_call.1} parent=5 // pred_region
        // Predicated region
        $region33: #{tpu_custom_call.1} parent=31 // pred_check
          %p181 = pneg %p34
        $region34: #{tpu_custom_call.1} parent=31 // pred_check_branch
          %183 = sbr.rel (%p181) target = $region36
        $region35: #{tpu_custom_call.1} parent=31 // pred_region
          %p184 = scmp.lt.s32.totalorder %s14, 1
          %s185 = scalar_select %p184, %s14, 1
          %s186 = smul.addr %s185, 2
          %s187 = smul.addr %s186, 8
          %s188 = scalar_lea.vmem %s0, %s187
        $region36: #{tpu_custom_call.1} parent=31 // pred_fallthru
          _
      $region32: #{tpu_custom_call.1} parent=5 // pred_fallthru
        _
      %p189 = scmp.le.s32.totalorder 1, %s14
      %p190 = scmp.lt.s32.totalorder %s14, 3
      %p191 = pnand %p189, %p190
      %p192 = pneg %p191
      // Predicated region
      $region37: #{tpu_custom_call.1} parent=5 // pred_check
        _
      $region38: #{tpu_custom_call.1} parent=5 // pred_check_branch
        %194 = sbr.rel (%p191) target = $region40
      $region39: #{tpu_custom_call.1} parent=5 // pred_region
        %s195 = ssub.s32 %s14, 1
        %p196 = scmp.lt.s32.totalorder %s19, 1
        %s197 = scalar_select %p196, %s19, 1
        %s198 = smul.addr %s197, 2
        %s199 = smul.addr %s198, 8
        %s200 = scalar_lea.vmem %s0, %s199
        %p201 = pneg %p40
        %p202 = pneg %p37
        %p203 = pneg %p61
        %p204 = pneg %p58
        %p205 = pneg %p82
        %p206 = pneg %p79
        %p207 = pneg %p103
        %p208 = pneg %p100
        %p209 = pneg %p124
        %p210 = pneg %p121
        %p211 = pneg %p150
        %p212 = pneg %p147
        %s213 = sand.u32 %s137, 1
        %s214 = scalar_lea.sflag [#allocation3], %s213
        %s215 = sand.u32 %s137, 1
        %s216 = smul.addr %s215, 8
        %s217 = scalar_lea.vmem [#allocation2], %s216
        %p218 = scmp.lt.s32.totalorder %s19, 1
        %s219 = scalar_select %p218, %s19, 1
        %s220 = smul.addr %s219, 2
        %s221 = smul.addr %s220, 8
        %s222 = scalar_lea.vmem %s0, %s221
        %v223 = vld [vmem:[%s222] sm:$0xff]
        %v224 = vld [vmem:[%s222 + $0x8] sm:$0xff]
        %v225 = vld [vmem:[%s1] sm:$0xff]
        %v226 = vld [vmem:[%s1 + $0x8] sm:$0xff]
        %v227 = vld [vmem:[%s1 + $0x10] sm:$0xff]
        %v228 = vld [vmem:[%s1 + $0x18] sm:$0xff]
        %v229 = vld [vmem:[%s1 + $0x20] sm:$0xff]
        %v230 = vld [vmem:[%s1 + $0x28] sm:$0xff]
        %v231 = vld [vmem:[%s1 + $0x30] sm:$0xff]
        %v232 = vld [vmem:[%s1 + $0x38] sm:$0xff]
        %v233 = vld [vmem:[%s1 + $0x40] sm:$0xff]
        %v234 = vld [vmem:[%s1 + $0x48] sm:$0xff]
        %v235 = vld [vmem:[%s1 + $0x50] sm:$0xff]
        %v236 = vld [vmem:[%s1 + $0x58] sm:$0xff]
        %v237 = vld [vmem:[%s1 + $0x60] sm:$0xff]
        %v238 = vld [vmem:[%s1 + $0x68] sm:$0xff]
        %v239 = vld [vmem:[%s1 + $0x70] sm:$0xff]
        %v240 = vld [vmem:[%s1 + $0x78] sm:$0xff]
        %v241 = vld [vmem:[%s1 + $0x80] sm:$0xff]
        %v242 = vld [vmem:[%s1 + $0x88] sm:$0xff]
        %v243 = vld [vmem:[%s1 + $0x90] sm:$0xff]
        %v244 = vld [vmem:[%s1 + $0x98] sm:$0xff]
        %v245 = vld [vmem:[%s1 + $0xa0] sm:$0xff]
        %v246 = vld [vmem:[%s1 + $0xa8] sm:$0xff]
        %v247 = vld [vmem:[%s1 + $0xb0] sm:$0xff]
        %v248 = vld [vmem:[%s1 + $0xb8] sm:$0xff]
        %v249 = vld [vmem:[%s2] sm:$0x1]
        %v251 = vperm.slane %v249, 0
        %vm253 = vcmask 523264
        %v255 = vsel %vm253, %v224, 0
        %257 = vmatpush.msra.mxu0 %v240
        %258 = vmatpush.msra.mxu0 %v239
        %259 = vmatpush.msra.mxu0 %v238
        %260 = vmatpush.msra.mxu0 %v237
        %261 = vmatpush.msra.mxu0 %v236
        %262 = vmatpush.msra.mxu0 %v235
        %263 = vmatpush.msra.mxu0 %v234
        %264 = vmatpush.msra.mxu0 %v233
        %265 = vmatpush.msra.mxu0 %v232
        %266 = vmatpush.msra.mxu0 %v231
        %267 = vmatpush.msra.mxu0 %v230
        %268 = vmatpush.msra.mxu0 %v229
        %269 = vmatpush.msra.mxu0 %v228
        %270 = vmatpush.msra.mxu0 %v227
        %271 = vmatpush.msra.mxu0 %v226
        %272 = vmatpush.msra.mxu0 %v225
        %273 = vmatmul.f32.gmra.mxu0 %v223
        %v274 = vpop.f32.mrf.mxu0
        %v275 = vadd.f32 %v251, %v274
        %276 = vdwg.mxu0
        %277 = vmatpush.msra.mxu0 0.0
        %278 = vmatpush.msra.mxu0 0.0
        %279 = vmatpush.msra.mxu0 0.0
        %280 = vmatpush.msra.mxu0 0.0
        %281 = vmatpush.msra.mxu0 0.0
        %282 = vmatpush.msra.mxu0 0.0
        %283 = vmatpush.msra.mxu0 0.0
        %284 = vmatpush.msra.mxu0 0.0
        %285 = vmatpush.msra.mxu0 %v248
        %286 = vmatpush.msra.mxu0 %v247
        %287 = vmatpush.msra.mxu0 %v246
        %288 = vmatpush.msra.mxu0 %v245
        %289 = vmatpush.msra.mxu0 %v244
        %290 = vmatpush.msra.mxu0 %v243
        %291 = vmatpush.msra.mxu0 %v242
        %292 = vmatpush.msra.mxu0 %v241
        %293 = vmatmul.f32.gmra.mxu0 %v255
        %v294 = vpop.f32.mrf.mxu0
        %v295 = vadd.f32 %v275, %v294
        %296 = vdwg.mxu0
        %v297 = vlaneseq
        %v298 = vshrl.u32 %v297, 7
        %vm299 = vcmp.eq.s32.totalorder %v298, 0
        %v300 = vld [vmem:[%s3] sm:$0x1]
        %v301 = vsel %vm299, 1, 0
        %vm302 = vcmp.eq.s32.totalorder %v301, 1
        %v304 = vperm.slane %v300, 0
        %v306 = vsel %vm302, %v304, %v295
        %v307 = vld [vmem:[%s4] sm:$0xff]
        %v308 = vadd.f32 %v306, %v307
        %vm309 = vcmask 261120
        %310 = vst.msk [vmem:[%s217] sm:$0xff] %vm309, %v308
        %s311 = sand.u32 %s137, 1
        %s312 = scalar_lea.sflag [#allocation3], %s311
        %s313 = sand.u32 %s137, 1
        %s314 = smul.addr %s313, 8
        %s315 = scalar_lea.vmem [#allocation2], %s314
        // Predicated region
        $region41: #{tpu_custom_call.1} parent=39 // pred_check
          %p316 = pneg %p147
        $region42: #{tpu_custom_call.1} parent=39 // pred_check_branch
          %318 = sbr.rel (%p316) target = $region44
        $region43: #{tpu_custom_call.1} parent=39 // pred_region
          %320 = vsyncadd %s312, 0
          %s321 = smul.addr %s19, 8
          %s322 = scalar_lea.hbm %s5, %s321
          %s324 = sshll.u32 %s315, 4
          %s325 = int_to_ptr.vmem [resolvable:$true] %s324
          %s326 = sshll.u32 %s322, 4
          %s327 = int_to_ptr.hbm [resolvable:$true] %s326
          %329 = dma.vmem_to_hbm [thread:$0]  %s325, 128, %s327, %s312
        $region44: #{tpu_custom_call.1} parent=39 // pred_fallthru
          _
      $region40: #{tpu_custom_call.1} parent=5 // pred_fallthru
        _
      %p330 = scmp.le.s32.totalorder 2, %s14
      // Predicated region
      $region45: #{tpu_custom_call.1} parent=5 // pred_check
        %p331 = pneg %p330
      $region46: #{tpu_custom_call.1} parent=5 // pred_check_branch
        %333 = sbr.rel (%p331) target = $region48
      $region47: #{tpu_custom_call.1} parent=5 // pred_region
        %s334 = ssub.s32 %s14, 2
        // Predicated region
        $region49: #{tpu_custom_call.1} parent=47 // pred_check
          %p335 = pneg %p153
        $region50: #{tpu_custom_call.1} parent=47 // pred_check_branch
          %337 = sbr.rel (%p335) target = $region52
        $region51: #{tpu_custom_call.1} parent=47 // pred_region
          %s338 = sand.u32 %s138, 1
          %s339 = scalar_lea.sflag [#allocation3], %s338
          %s340 = sand.u32 %s138, 1
          %s341 = smul.addr %s340, 8
          %s342 = scalar_lea.vmem [#allocation2], %s341
          %344 = dma.done %s339, 128
        $region52: #{tpu_custom_call.1} parent=47 // pred_fallthru
          _
      $region48: #{tpu_custom_call.1} parent=5 // pred_fallthru
        _
    $region6: #{tpu_custom_call.1} parent=1 // loop_footer
      %s18 = sadd.s32 1, %s14
    $region7: #{tpu_custom_call.1} parent=1 // loop_footer_branch
      %13 = sbr.rel target = $region3
    $region8: #{tpu_custom_call.1} parent=1 // loop_exit
      _
    %345 = vsyncpa [#allocation3], 1
    %s346 = scalar_lea.sflag [#allocation3], 1
    %347 = vsyncpa %s346, 1

</llo_original>
